<compile_context>
chip_gen: v7x
topology: tpu7x:2x2x1
jax: 0.10.0
libtpu: 0.0.40
codegen_flags: <defaults>
</compile_context>

<pallas_src>
import jax
import jax.numpy as jnp
from jax import lax
from jax.experimental import pallas as pl
from jax.experimental.pallas import tpu as pltpu

_LANE = 128
_MAX_HW_TILE = 8192  # lanes per HW tile, upper cap


def _round_up(n, m):
    return ((n + m - 1) // m) * m


def _vmem_budgets():
    """Returns (per-input-block byte budget, vmem_limit_bytes), generation aware."""
    cap = 128 * 1024 * 1024
    try:
        info = pltpu.get_tpu_info()
        cap = int(getattr(info, "vmem_capacity_bytes", cap))
    except Exception:
        pass
    if cap <= 64 * 1024 * 1024:           # v7x-class: 64 MiB per TensorCore
        return 8 * 1024 * 1024, 48 * 1024 * 1024
    return 12 * 1024 * 1024, 64 * 1024 * 1024   # v5e / v6e: 128 MiB physical


def _pick_c_tile(C):
    # 128 keeps the register-resident per-step accumulators small (~16-32
    # vregs) and gives >=2 parallel (b, c) tiles even for B=1 when C>=256
    # (feeds both v7x TensorCores).  Output block last dim must be a multiple
    # of 128 or equal to C.
    if C % 128 == 0:
        return 128
    return C


def _pick_hw_tiling(HW, c_tile, itemsize, block_budget):
    """Choose (hw_tile, n_hw_steps); hw_tile is a multiple of 128 and HW is
    padded (by the wrapper) up to hw_tile * n_hw_steps."""
    hw128 = _round_up(HW, _LANE)
    max_tile = block_budget // max(1, c_tile * itemsize)
    max_tile = max(_LANE, min(_MAX_HW_TILE, (max_tile // _LANE) * _LANE))
    if hw128 <= max_tile:
        return hw128, 1                      # single HW step, minimal padding
    n_steps = -(-hw128 // max_tile)
    hw_tile = _round_up(-(-HW // n_steps), _LANE)   # equal-ish tiles, small pad
    return hw_tile, n_steps


def _make_kernel(*, hw_tile, c_tile, dtype):
    n_chunks = hw_tile // _LANE
    if n_chunks % 4 == 0:
        group = 4
    elif n_chunks % 2 == 0:
        group = 2
    else:
        group = 1
    n_groups = n_chunks // group

    def kernel(x_ref, m_ref, o_ref, acc_ref):
        # x_ref: (c_tile, hw_tile), m_ref: (1, hw_tile),
        # o_ref: (2, c_tile),       acc_ref: (2, c_tile, 128) scratch (x dtype).
        h = pl.program_id(2)

        @pl.when(h == 0)
        def _init():
            acc_ref[...] = jnp.full(acc_ref.shape, -jnp.inf, acc_ref.dtype)

        def chunk(lo, am, ai):
            xk = x_ref[:, pl.ds(lo, _LANE)]       # (c_tile, 128)
            mk = m_ref[:, pl.ds(lo, _LANE)]       # (1, 128) broadcast over channels
            xm = xk * mk
            xim = xk * (1.0 - mk)                 # exact x*(1-mask), soft masks too
            return jnp.maximum(am, xm), jnp.maximum(ai, xim)

        neg = jnp.full((c_tile, _LANE), -jnp.inf, dtype)

        if n_groups == 1:
            # Tiny trip count: straight-line code.
            am, ai = neg, neg
            for j in range(group):
                am, ai = chunk(j * _LANE, am, ai)
        else:
            def body(g, carry):
                am, ai = carry
                base = pl.multiple_of(g * (group * _LANE), group * _LANE)
                for j in range(group):
                    am, ai = chunk(base + j * _LANE, am, ai)
                return am, ai

            am, ai = lax.fori_loop(0, n_groups, body, (neg, neg))

        # Single scratch read-modify-write per grid step (not per chunk).
        acc_ref[0] = jnp.maximum(acc_ref[0], am)
        acc_ref[1] = jnp.maximum(acc_ref[1], ai)

        # One cross-lane reduce + lane-dense store, only on the last HW step.
        @pl.when(h == pl.num_programs(2) - 1)
        def _finalize():
            o_ref[...] = jnp.max(acc_ref[...], axis=-1).astype(o_ref.dtype)

    return kernel


def masked_global_max_pool2d(x, mask):
    """x: (B, C, H, W); mask: broadcastable to (B, 1, H, W).

    Returns (B, 2C) = concat(global_max(x*mask), global_max(x*(1-mask)), dim=1),
    matching the PyTorch MaskedGlobalMaxPool2d forward.
    """
    B, C, H, W = x.shape
    HW = H * W
    dtype = x.dtype
    itemsize = jnp.dtype(dtype).itemsize

    x_flat = x.reshape(B, C, HW)
    m_flat = jnp.broadcast_to(mask, (B, 1, H, W)).reshape(B, 1, HW).astype(dtype)

    block_budget, vmem_limit = _vmem_budgets()
    c_tile = _pick_c_tile(C)
    hw_tile, n_hw_steps = _pick_hw_tiling(HW, c_tile, itemsize, block_budget)
    hw_padded = hw_tile * n_hw_steps

    if hw_padded != HW:
        pad = hw_padded - HW
        # Pad x with a huge negative finite value and the mask with 0.5 so that
        # both x*m and x*(1-m) are hugely negative in padded lanes and can
        # never win the max; this removes all edge masking from the kernel.
        neg = float(jnp.finfo(dtype).min)
        x_flat = jnp.pad(x_flat, ((0, 0), (0, 0), (0, pad)), constant_values=neg)
        m_flat = jnp.pad(m_flat, ((0, 0), (0, 0), (0, pad)), constant_values=0.5)

    grid = (B, C // c_tile, n_hw_steps)
    kernel = _make_kernel(hw_tile=hw_tile, c_tile=c_tile, dtype=dtype)

    out = pl.pallas_call(
        kernel,
        out_shape=jax.ShapeDtypeStruct((B, 2, C), dtype),
        grid_spec=pltpu.PrefetchScalarGridSpec(
            num_scalar_prefetch=0,
            grid=grid,
            in_specs=[
                pl.BlockSpec((None, c_tile, hw_tile), lambda b, c, h: (b, c, h)),
                pl.BlockSpec((None, 1, hw_tile), lambda b, c, h: (b, 0, h)),
            ],
            out_specs=pl.BlockSpec((None, 2, c_tile), lambda b, c, h: (b, 0, c)),
            scratch_shapes=[pltpu.VMEM((2, c_tile, _LANE), dtype)],
        ),
        compiler_params=pltpu.CompilerParams(
            dimension_semantics=("parallel", "parallel", "arbitrary"),
            vmem_limit_bytes=vmem_limit,
        ),
    )(x_flat, m_flat)

    # (B, 2, C) -> (B, 2C) is exactly torch.cat((pooled_m, pooled_inv), dim=1).
    return out.reshape(B, 2 * C)


def _reference(x, mask):
    B, C = x.shape[0], x.shape[1]
    xm = (x * mask).reshape(B, C, -1).max(axis=2)
    xi = (x * (1.0 - mask)).reshape(B, C, -1).max(axis=2)
    return jnp.concatenate([xm, xi], axis=1)


if __name__ == "__main__":
    key = jax.random.PRNGKey(0)
    kx, km, kx2, km2 = jax.random.split(key, 4)

    # Case 1: binary mask, aligned spatial size.
    B, C, H, W = 2, 4, 16, 16
    x = jax.random.normal(kx, (B, C, H, W), dtype=jnp.float32)
    mask = (jax.random.uniform(km, (B, 1, H, W)) > 0.5).astype(jnp.float32)
    out = jax.block_until_ready(masked_global_max_pool2d(x, mask))
    ref = _reference(x, mask)
    assert out.shape == (B, 2 * C), out.shape
    assert jnp.allclose(out, ref, atol=1e-6, rtol=1e-6), "mismatch (binary mask)"

    # Case 2: soft mask, awkward spatial size (exercises the padding path).
    B2, C2, H2, W2 = 1, 3, 13, 13
    x2 = jax.random.normal(kx2, (B2, C2, H2, W2), dtype=jnp.float32)
    mask2 = jax.random.uniform(km2, (B2, 1, H2, W2), dtype=jnp.float32)
    out2 = jax.block_until_ready(masked_global_max_pool2d(x2, mask2))
    ref2 = _reference(x2, mask2)
    assert out2.shape == (B2, 2 * C2), out2.shape
    assert jnp.allclose(out2, ref2, atol=1e-6, rtol=1e-6), "mismatch (soft mask)"

    print("KERNEL_OK")
</pallas_src>

<mosaic_0001>
module attributes {stable_mosaic.version = 11 : i64} {
  func.func @kernel(%arg0: i32, %arg1: i32, %arg2: i32, %arg3: memref<1x4x256xf32, #tpu.memory_space<vmem>>, %arg4: memref<1x1x256xf32, #tpu.memory_space<vmem>>, %arg5: memref<1x2x4xf32, #tpu.memory_space<vmem>>, %arg6: memref<2x4x128xf32, #tpu.memory_space<vmem>>) attributes {dimension_semantics = [#tpu.dimension_semantics<parallel>, #tpu.dimension_semantics<parallel>, #tpu.dimension_semantics<arbitrary>], iteration_bounds = array<i64: 2, 1, 1>, scalar_prefetch = 0 : i64, scratch_operands = 1 : i64, tpu.core_type = #tpu.core_type<tc>, window_params = [{transform_indices = @transform_0, window_bounds = array<i64: 1, 4, 256>}, {transform_indices = @transform_1, window_bounds = array<i64: 1, 1, 256>}, {transform_indices = @transform_2, window_bounds = array<i64: 1, 2, 4>}]} {
    %c0_i32 = arith.constant 0 : i32
    %0 = arith.cmpi eq, %arg2, %c0_i32 : i32
    %1 = arith.extui %0 : i1 to i32
    %c0_i32_0 = arith.constant 0 : i32
    %2 = arith.cmpi ne, %1, %c0_i32_0 : i32
    scf.if %2 {
      %cst_26 = arith.constant 0xFF800000 : f32
      %43 = vector.broadcast %cst_26 : f32 to vector<2x4x128xf32>
      %c0_27 = arith.constant 0 : index
      %c0_28 = arith.constant 0 : index
      %c0_29 = arith.constant 0 : index
      %44 = vector.load %arg6[%c0_27, %c0_28, %c0_29] : memref<2x4x128xf32, #tpu.memory_space<vmem>>, vector<2x4x128xf32>
      tpu.vector_store %arg6[%c0_27, %c0_28, %c0_29], %43 {strides = array<i32>} : memref<2x4x128xf32, #tpu.memory_space<vmem>>, vector<2x4x128xf32>,
    } else {
    }
    %cst = arith.constant 0xFF800000 : f32
    %3 = vector.broadcast %cst : f32 to vector<4x128xf32>
    %c0 = arith.constant 0 : index
    %c0_1 = arith.constant 0 : index
    %c0_2 = arith.constant 0 : index
    %4 = vector.load %arg3[%c0, %c0_1, %c0_2] : memref<1x4x256xf32, #tpu.memory_space<vmem>>, vector<1x4x128xf32>
    %5 = vector.shape_cast %4 : vector<1x4x128xf32> to vector<4x128xf32>
    %c0_3 = arith.constant 0 : index
    %c0_4 = arith.constant 0 : index
    %c0_5 = arith.constant 0 : index
    %6 = vector.load %arg4[%c0_3, %c0_4, %c0_5] : memref<1x1x256xf32, #tpu.memory_space<vmem>>, vector<1x1x128xf32>
    %7 = vector.shape_cast %6 : vector<1x1x128xf32> to vector<1x128xf32>
    %8 = vector.broadcast %7 : vector<1x128xf32> to vector<4x128xf32>
    %9 = arith.mulf %5, %8 : vector<4x128xf32>
    %cst_6 = arith.constant 1.000000e+00 : f32
    %10 = vector.broadcast %cst_6 : f32 to vector<1x128xf32>
    %11 = arith.subf %10, %7 : vector<1x128xf32>
    %12 = vector.broadcast %11 : vector<1x128xf32> to vector<4x128xf32>
    %13 = arith.mulf %5, %12 : vector<4x128xf32>
    %14 = arith.maximumf %3, %9 : vector<4x128xf32>
    %15 = arith.maximumf %3, %13 : vector<4x128xf32>
    %c0_7 = arith.constant 0 : index
    %c0_8 = arith.constant 0 : index
    %c128 = arith.constant 128 : index
    %16 = vector.load %arg3[%c0_7, %c0_8, %c128] : memref<1x4x256xf32, #tpu.memory_space<vmem>>, vector<1x4x128xf32>
    %17 = vector.shape_cast %16 : vector<1x4x128xf32> to vector<4x128xf32>
    %c0_9 = arith.constant 0 : index
    %c0_10 = arith.constant 0 : index
    %c128_11 = arith.constant 128 : index
    %18 = vector.load %arg4[%c0_9, %c0_10, %c128_11] : memref<1x1x256xf32, #tpu.memory_space<vmem>>, vector<1x1x128xf32>
    %19 = vector.shape_cast %18 : vector<1x1x128xf32> to vector<1x128xf32>
    %20 = vector.broadcast %19 : vector<1x128xf32> to vector<4x128xf32>
    %21 = arith.mulf %17, %20 : vector<4x128xf32>
    %cst_12 = arith.constant 1.000000e+00 : f32
    %22 = vector.broadcast %cst_12 : f32 to vector<1x128xf32>
    %23 = arith.subf %22, %19 : vector<1x128xf32>
    %24 = vector.broadcast %23 : vector<1x128xf32> to vector<4x128xf32>
    %25 = arith.mulf %17, %24 : vector<4x128xf32>
    %26 = arith.maximumf %14, %21 : vector<4x128xf32>
    %27 = arith.maximumf %15, %25 : vector<4x128xf32>
    %c0_13 = arith.constant 0 : index
    %c0_14 = arith.constant 0 : index
    %c0_15 = arith.constant 0 : index
    %28 = vector.load %arg6[%c0_13, %c0_14, %c0_15] : memref<2x4x128xf32, #tpu.memory_space<vmem>>, vector<1x4x128xf32>
    %29 = vector.shape_cast %28 : vector<1x4x128xf32> to vector<4x128xf32>
    %30 = arith.maximumf %29, %26 : vector<4x128xf32>
    %c0_16 = arith.constant 0 : index
    %c0_17 = arith.constant 0 : index
    %c0_18 = arith.constant 0 : index
    %31 = vector.load %arg6[%c0_16, %c0_17, %c0_18] : memref<2x4x128xf32, #tpu.memory_space<vmem>>, vector<1x4x128xf32>
    %32 = vector.shape_cast %31 : vector<1x4x128xf32> to vector<4x128xf32>
    %33 = vector.shape_cast %30 : vector<4x128xf32> to vector<1x4x128xf32>
    tpu.vector_store %arg6[%c0_16, %c0_17, %c0_18], %33 {strides = array<i32>} : memref<2x4x128xf32, #tpu.memory_space<vmem>>, vector<1x4x128xf32>,
    %c1 = arith.constant 1 : index
    %c0_19 = arith.constant 0 : index
    %c0_20 = arith.constant 0 : index
    %34 = vector.load %arg6[%c1, %c0_19, %c0_20] : memref<2x4x128xf32, #tpu.memory_space<vmem>>, vector<1x4x128xf32>
    %35 = vector.shape_cast %34 : vector<1x4x128xf32> to vector<4x128xf32>
    %36 = arith.maximumf %35, %27 : vector<4x128xf32>
    %c1_21 = arith.constant 1 : index
    %c0_22 = arith.constant 0 : index
    %c0_23 = arith.constant 0 : index
    %37 = vector.load %arg6[%c1_21, %c0_22, %c0_23] : memref<2x4x128xf32, #tpu.memory_space<vmem>>, vector<1x4x128xf32>
    %38 = vector.shape_cast %37 : vector<1x4x128xf32> to vector<4x128xf32>
    %39 = vector.shape_cast %36 : vector<4x128xf32> to vector<1x4x128xf32>
    tpu.vector_store %arg6[%c1_21, %c0_22, %c0_23], %39 {strides = array<i32>} : memref<2x4x128xf32, #tpu.memory_space<vmem>>, vector<1x4x128xf32>,
    %c0_i32_24 = arith.constant 0 : i32
    %40 = arith.cmpi eq, %arg2, %c0_i32_24 : i32
    %41 = arith.extui %40 : i1 to i32
    %c0_i32_25 = arith.constant 0 : i32
    %42 = arith.cmpi ne, %41, %c0_i32_25 : i32
    scf.if %42 {
      %c0_26 = arith.constant 0 : index
      %c0_27 = arith.constant 0 : index
      %c0_28 = arith.constant 0 : index
      %43 = vector.load %arg6[%c0_26, %c0_27, %c0_28] : memref<2x4x128xf32, #tpu.memory_space<vmem>>, vector<2x4x128xf32>
      %cst_29 = arith.constant dense<0xFF800000> : vector<2x4xf32>
      %44 = vector.multi_reduction <maximumf>, %43, %cst_29 [2] : vector<2x4x128xf32> to vector<2x4xf32>
      %c0_30 = arith.constant 0 : index
      %c0_31 = arith.constant 0 : index
      %c0_32 = arith.constant 0 : index
      %45 = vector.load %arg5[%c0_30, %c0_31, %c0_32] : memref<1x2x4xf32, #tpu.memory_space<vmem>>, vector<1x2x4xf32>
      %46 = vector.shape_cast %45 : vector<1x2x4xf32> to vector<2x4xf32>
      %47 = vector.shape_cast %44 : vector<2x4xf32> to vector<1x2x4xf32>
      tpu.vector_store %arg5[%c0_30, %c0_31, %c0_32], %47 {strides = array<i32>} : memref<1x2x4xf32, #tpu.memory_space<vmem>>, vector<1x2x4xf32>,
    } else {
    }
    return
  }
  func.func @transform_0(%arg0: i32, %arg1: i32, %arg2: i32) -> (i32, i32, i32) {
    %c0_i32 = arith.constant 0 : i32
    return %arg0, %arg1, %arg2 : i32, i32, i32
  }
  func.func @transform_1(%arg0: i32, %arg1: i32, %arg2: i32) -> (i32, i32, i32) {
    %c0_i32 = arith.constant 0 : i32
    %c0_i32_0 = arith.constant 0 : i32
    return %arg0, %c0_i32, %arg2 : i32, i32, i32
  }
  func.func @transform_2(%arg0: i32, %arg1: i32, %arg2: i32) -> (i32, i32, i32) {
    %c0_i32 = arith.constant 0 : i32
    %c0_i32_0 = arith.constant 0 : i32
    return %arg0, %c0_i32, %arg1 : i32, i32, i32
  }
}

</mosaic_0001>

<llo_original>
// kernel: tpu_custom_call.1
$region0: #{tpu_custom_call.1}
  #allocation0 [shape = 'u32[]', space=smem, size = 0x4, offset = 0x4, fixed_abs, tag = 'smem constant byte address 0x4 - core index']
  #allocation1 [shape = 'u32[144,128]{1,0:T(1,128)}', space=vmem, size = 0x12000, scoped, tag = 'internal scratch']
  #allocation2 [shape = 'f32[2,4,128]{2,1,0:T(4,128)}', space=vmem, size = 0x1000, scoped, tag = 'scratch operand']
  %s0 = inlined_call_operand.hbm [shape: f32[2,4,256], index: 0, kind: input, shape index: {}]
  %s1 = inlined_call_operand.hbm [shape: f32[2,1,256], index: 1, kind: input, shape index: {}]
  %s2 = inlined_call_operand.hbm [shape: f32[2,2,4], index: 2, kind: output, shape index: {}]
  %s3 = sld [smem:[#allocation0]]
  $region57: #{tpu_custom_call.1} parent=0
    _
  %s5 = ssub.s32 1, %s3
  %s6 = scalar_select 0, %s5, %s3
  $region1: #{tpu_custom_call.1} parent=0
    #allocation3 [shape = 'u8[8192]{0}', space=vmem, size = 0x2000, scoped, tag = 'input window, operand 0']
    #allocation4 [shape = 's32[2]{0}', space=sflag, size = 0x8, scoped, tag = 'scoped memory for tpu_custom_call.1']
    #allocation5 [shape = 's32[2]{0}', space=sflag, size = 0x8, scoped, tag = 'scoped memory for tpu_custom_call.1']
    #allocation6 [shape = 'u8[2048]{0}', space=vmem, size = 0x800, scoped, tag = 'input window, operand 1']
    #allocation7 [shape = 's32[2]{0}', space=sflag, size = 0x8, scoped, tag = 'scoped memory for tpu_custom_call.1']
    #allocation8 [shape = 'u8[2048]{0}', space=vmem, size = 0x800, scoped, tag = 'output window, operand 0']
    %7 = vsyncpa [#allocation4], 0
    %s8 = scalar_lea.sflag [#allocation4], 1
    %9 = vsyncpa %s8, 0
    %10 = vsyncpa [#allocation7], 0
    %s11 = scalar_lea.sflag [#allocation7], 1
    %12 = vsyncpa %s11, 0
    %13 = vsyncpa [#allocation5], 0
    %s14 = scalar_lea.sflag [#allocation5], 1
    %15 = vsyncpa %s14, 0
    loop: start=0, step=1, limit=4
    $region2: #{tpu_custom_call.1} parent=1 // loop_pre_header
      _
    $region3: #{tpu_custom_call.1} parent=1 // loop_header
      %s17 = sphi 0, %s21
      %p18 = scmp.ge.s32.totalorder %s17, 4
      %s24 = sphi 0, %s43
      %s25 = sphi 0, %s39
      %s26 = sphi 0, %s35
      %s27 = sphi 0, %s24
      %s28 = sphi 0, %s25
      %s29 = sphi 0, %s26
      %s30 = sphi 0, %s27
      %s31 = sphi 0, %s28
      %s32 = sphi 0, %s29
      %s50 = sphi 0, %s52
      %s53 = sphi 0, %s50
      %s54 = sphi 0, %s53
      %s70 = sphi 0, %s54
      %s78 = sphi 0, %s80
      %s81 = sphi 0, %s78
      %s82 = sphi 0, %s81
      %s98 = sphi 0, %s82
      %s106 = sphi 0, %s108
      %s109 = sphi 0, %s106
      %s110 = sphi 0, %s109
      %s126 = sphi 0, %s110
    $region4: #{tpu_custom_call.1} parent=1 // loop_header_branch
      %20 = sbr.rel (%p18) target = $region8
    $region5: #{tpu_custom_call.1} parent=1 // loop_body
      %s22 = ssub.s32 %s17, 1
      %s23 = ssub.s32 %s17, 2
      %s33 = sadd.s32 1, %s26
      %p34 = scmp.ge.s32.totalorder %s33, 1
      %s35 = scalar_select %p34, 0, %s33
      %s36 = sadd.s32 1, %s25
      %s37 = scalar_select %p34, %s36, %s25
      %p38 = scmp.ge.s32.totalorder %s37, 1
      %s39 = scalar_select %p38, 0, %s37
      %s40 = sadd.s32 1, %s24
      %s41 = scalar_select %p38, %s40, %s24
      %p42 = scmp.ge.s32.totalorder %s41, 2
      %s43 = scalar_select %p42, 0, %s41
      %s44 = ssub.s32 %s24, %s43
      %s45 = ssub.s32 %s25, %s39
      %s46 = sor.u32 %s44, %s45
      %s47 = ssub.s32 %s26, %s35
      %s48 = sor.u32 %s46, %s47
      %p49 = scmp.eq.s32.totalorder %s48, 0
      %s51 = sadd.s32 %s50, 1
      %s52 = scalar_select %p49, %s50, %s51
      %p55 = pneg %p49
      %p56 = scmp.eq.s32.totalorder %s17, 1
      %p57 = por %p55, %p56
      %p58 = scmp.ne.s32.totalorder %s50, %s53
      %p59 = scmp.eq.s32.totalorder %s17, 0
      %p60 = por %p58, %p59
      %p61 = scmp.ne.s32.totalorder %s50, %s53
      %p62 = scmp.eq.s32.totalorder %s22, 1
      %p63 = por %p61, %p62
      %p64 = scmp.ne.s32.totalorder %s53, %s54
      %p65 = scmp.eq.s32.totalorder %s22, 0
      %p66 = por %p64, %p65
      %p67 = scmp.ne.s32.totalorder %s53, %s54
      %p68 = scmp.eq.s32.totalorder %s23, 1
      %p69 = por %p67, %p68
      %p71 = scmp.ne.s32.totalorder %s54, %s70
      %p72 = scmp.eq.s32.totalorder %s23, 0
      %p73 = por %p71, %p72
      %s74 = ssub.s32 %s24, %s43
      %s75 = ssub.s32 %s26, %s35
      %s76 = sor.u32 %s74, %s75
      %p77 = scmp.eq.s32.totalorder %s76, 0
      %s79 = sadd.s32 %s78, 1
      %s80 = scalar_select %p77, %s78, %s79
      %p83 = pneg %p77
      %p84 = scmp.eq.s32.totalorder %s17, 1
      %p85 = por %p83, %p84
      %p86 = scmp.ne.s32.totalorder %s78, %s81
      %p87 = scmp.eq.s32.totalorder %s17, 0
      %p88 = por %p86, %p87
      %p89 = scmp.ne.s32.totalorder %s78, %s81
      %p90 = scmp.eq.s32.totalorder %s22, 1
      %p91 = por %p89, %p90
      %p92 = scmp.ne.s32.totalorder %s81, %s82
      %p93 = scmp.eq.s32.totalorder %s22, 0
      %p94 = por %p92, %p93
      %p95 = scmp.ne.s32.totalorder %s81, %s82
      %p96 = scmp.eq.s32.totalorder %s23, 1
      %p97 = por %p95, %p96
      %p99 = scmp.ne.s32.totalorder %s82, %s98
      %p100 = scmp.eq.s32.totalorder %s23, 0
      %p101 = por %p99, %p100
      %s102 = ssub.s32 %s24, %s43
      %s103 = ssub.s32 %s25, %s39
      %s104 = sor.u32 %s102, %s103
      %p105 = scmp.eq.s32.totalorder %s104, 0
      %s107 = sadd.s32 %s106, 1
      %s108 = scalar_select %p105, %s106, %s107
      %p111 = pneg %p105
      %p112 = scmp.eq.s32.totalorder %s17, 1
      %p113 = por %p111, %p112
      %p114 = scmp.ne.s32.totalorder %s106, %s109
      %p115 = scmp.eq.s32.totalorder %s17, 0
      %p116 = por %p114, %p115
      %p117 = scmp.ne.s32.totalorder %s106, %s109
      %p118 = scmp.eq.s32.totalorder %s22, 1
      %p119 = por %p117, %p118
      %p120 = scmp.ne.s32.totalorder %s109, %s110
      %p121 = scmp.eq.s32.totalorder %s22, 0
      %p122 = por %p120, %p121
      %p123 = scmp.ne.s32.totalorder %s109, %s110
      %p124 = scmp.eq.s32.totalorder %s23, 1
      %p125 = por %p123, %p124
      %p127 = scmp.ne.s32.totalorder %s110, %s126
      %p128 = scmp.eq.s32.totalorder %s23, 0
      %p129 = por %p127, %p128
      %p130 = scmp.le.s32.totalorder 1, %s17
      %p131 = scmp.lt.s32.totalorder %s17, 3
      %p132 = pnand %p130, %p131
      %p133 = pneg %p132
      // Predicated region
      $region9: #{tpu_custom_call.1} parent=5 // pred_check
        _
      $region10: #{tpu_custom_call.1} parent=5 // pred_check_branch
        %135 = sbr.rel (%p132) target = $region12
      $region11: #{tpu_custom_call.1} parent=5 // pred_region
        %s136 = ssub.s32 %s17, 1
      $region12: #{tpu_custom_call.1} parent=5 // pred_fallthru
        _
      %p137 = scmp.lt.s32.totalorder %s17, 2
      // Predicated region
      $region13: #{tpu_custom_call.1} parent=5 // pred_check
        %p138 = pneg %p137
      $region14: #{tpu_custom_call.1} parent=5 // pred_check_branch
        %140 = sbr.rel (%p138) target = $region16
      $region15: #{tpu_custom_call.1} parent=5 // pred_region
        // Predicated region
        $region17: #{tpu_custom_call.1} parent=15 // pred_check
          %p141 = pneg %p60
        $region18: #{tpu_custom_call.1} parent=15 // pred_check_branch
          %143 = sbr.rel (%p141) target = $region20
        $region19: #{tpu_custom_call.1} parent=15 // pred_region
          %s144 = sand.u32 %s50, 1
          %s145 = scalar_lea.sflag [#allocation4], %s144
          %s146 = sand.u32 %s50, 1
          %s147 = smul.addr %s146, 8
          %s148 = scalar_lea.vmem [#allocation3], %s147
          %s149 = smul.u32 2, %s26
          %s151 = ssub.s32 128, 128
          %152 = vsyncadd %s145, %s151
          %s153 = smul.addr %s25, 2
          %s154 = sadd.s32 %s149, %s153
          %s155 = smul.addr %s24, 2
          %s156 = sadd.s32 %s154, %s155
          %s157 = smul.addr %s156, 64
          %s158 = scalar_lea.hbm %s0, %s157
          %s160 = sshll.u32 %s148, 4
          %s161 = int_to_ptr.vmem [resolvable:$true] %s160
          %163 = dma.hbm_to_vmem [thread:$0]  %s158, 128, %s161, %s145
        $region20: #{tpu_custom_call.1} parent=15 // pred_fallthru
          _
        // Predicated region
        $region21: #{tpu_custom_call.1} parent=15 // pred_check
          %p164 = pneg %p88
        $region22: #{tpu_custom_call.1} parent=15 // pred_check_branch
          %166 = sbr.rel (%p164) target = $region24
        $region23: #{tpu_custom_call.1} parent=15 // pred_region
          %s167 = sand.u32 %s78, 1
          %s168 = scalar_lea.sflag [#allocation7], %s167
          %s169 = sand.u32 %s78, 1
          %s170 = smul.addr %s169, 2
          %s171 = scalar_lea.vmem [#allocation6], %s170
          %s172 = smul.u32 2, %s26
          %s174 = ssub.s32 32, 32
          %175 = vsyncadd %s168, %s174
          %s176 = smul.addr %s24, 2
          %s177 = sadd.s32 %s172, %s176
          %s178 = smul.addr %s177, 16
          %s179 = scalar_lea.hbm %s1, %s178
          %s181 = sshll.u32 %s171, 4
          %s182 = int_to_ptr.vmem [resolvable:$true] %s181
          %184 = dma.hbm_to_vmem [thread:$0]  %s179, 32, %s182, %s168
        $region24: #{tpu_custom_call.1} parent=15 // pred_fallthru
          _
      $region16: #{tpu_custom_call.1} parent=5 // pred_fallthru
        _
      %p185 = scmp.le.s32.totalorder 1, %s17
      %p186 = scmp.lt.s32.totalorder %s17, 3
      %p187 = pnand %p185, %p186
      %p188 = pneg %p187
      // Predicated region
      $region25: #{tpu_custom_call.1} parent=5 // pred_check
        _
      $region26: #{tpu_custom_call.1} parent=5 // pred_check_branch
        %190 = sbr.rel (%p187) target = $region28
      $region27: #{tpu_custom_call.1} parent=5 // pred_region
        %s191 = ssub.s32 %s17, 1
        %s192 = sand.u32 %s53, 1
        %s193 = scalar_lea.sflag [#allocation4], %s192
        %s194 = sand.u32 %s53, 1
        %s195 = smul.addr %s194, 8
        %s196 = scalar_lea.vmem [#allocation3], %s195
        // Predicated region
        $region29: #{tpu_custom_call.1} parent=27 // pred_check
          %p197 = pneg %p66
        $region30: #{tpu_custom_call.1} parent=27 // pred_check_branch
          %199 = sbr.rel (%p197) target = $region32
        $region31: #{tpu_custom_call.1} parent=27 // pred_region
          %200 = dma.done %s193, 128
        $region32: #{tpu_custom_call.1} parent=27 // pred_fallthru
          _
        %s201 = sand.u32 %s81, 1
        %s202 = scalar_lea.sflag [#allocation7], %s201
        %s203 = sand.u32 %s81, 1
        %s204 = smul.addr %s203, 2
        %s205 = scalar_lea.vmem [#allocation6], %s204
        // Predicated region
        $region33: #{tpu_custom_call.1} parent=27 // pred_check
          %p206 = pneg %p94
        $region34: #{tpu_custom_call.1} parent=27 // pred_check_branch
          %208 = sbr.rel (%p206) target = $region36
        $region35: #{tpu_custom_call.1} parent=27 // pred_region
          %209 = dma.done %s202, 32
        $region36: #{tpu_custom_call.1} parent=27 // pred_fallthru
          _
        %s210 = sand.u32 %s53, 1
        %s211 = scalar_lea.sflag [#allocation4], %s210
        %s212 = sand.u32 %s53, 1
        %s213 = smul.addr %s212, 8
        %s214 = scalar_lea.vmem [#allocation3], %s213
        %p215 = pneg %p66
        %p216 = pneg %p63
        %s217 = sand.u32 %s81, 1
        %s218 = scalar_lea.sflag [#allocation7], %s217
        %s219 = sand.u32 %s81, 1
        %s220 = smul.addr %s219, 2
        %s221 = scalar_lea.vmem [#allocation6], %s220
        %p222 = pneg %p94
        %p223 = pneg %p91
        %p224 = pneg %p122
        %p225 = pneg %p119
        %s226 = sand.u32 %s109, 1
        %s227 = scalar_lea.sflag [#allocation5], %s226
        %s228 = sand.u32 %s109, 1
        %s229 = smul.addr %s228, 2
        %s230 = scalar_lea.vmem [#allocation8], %s229
        %s231 = smul.u32 2, %s29
        %s232 = smul.u32 2, %s29
        %p233 = scmp.eq.s32.totalorder %s29, 0
        // Predicated region
        $region37: #{tpu_custom_call.1} parent=27 // pred_check
          %p234 = pneg %p233
        $region38: #{tpu_custom_call.1} parent=27 // pred_check_branch
          %236 = sbr.rel (%p234) target = $region40
        $region39: #{tpu_custom_call.1} parent=27 // pred_region
          %237 = vst [vmem:[#allocation2] sm:$0xf] -inf
          %238 = vst [vmem:[#allocation2 + $0x4] sm:$0xf] -inf
        $region40: #{tpu_custom_call.1} parent=27 // pred_fallthru
          _
        %v239 = vld [vmem:[%s196] sm:$0xf]
        %v240 = vld [vmem:[%s205] sm:$0x1]
        %v242 = vlaneseq
        %v243 = vshrl.u32 %v242, 7
        %v244 = vsub.s32 0, %v243
        %v245 = vrot.slane %v240, %v244
        %v247 = vmul.f32 %v239, %v245
        %v248 = vsub.f32 1.0, %v240
        %v250 = vlaneseq
        %v251 = vshrl.u32 %v250, 7
        %v252 = vsub.s32 0, %v251
        %v253 = vrot.slane %v248, %v252
        %v255 = vmul.f32 %v239, %v253
        %v256 = vld [vmem:[%s196 + $0x4] sm:$0xf]
        %v257 = vld [vmem:[%s205 + $0x1] sm:$0x1]
        %v259 = vlaneseq
        %v260 = vshrl.u32 %v259, 7
        %v261 = vsub.s32 0, %v260
        %v262 = vrot.slane %v257, %v261
        %v264 = vmul.f32 %v256, %v262
        %v265 = vsub.f32 1.0, %v257
        %v267 = vlaneseq
        %v268 = vshrl.u32 %v267, 7
        %v269 = vsub.s32 0, %v268
        %v270 = vrot.slane %v265, %v269
        %v272 = vmul.f32 %v256, %v270
        %v273 = vmax.f32 %v247, %v264
        %v274 = vmax.f32 %v255, %v272
        %v275 = vld [vmem:[#allocation2] sm:$0xf]
        %v276 = vmax.f32 %v275, %v273
        %277 = vst [vmem:[#allocation2] sm:$0xf] %v276
        %s278 = scalar_lea.vmem [#allocation2], 4
        %v279 = vld [vmem:[%s278] sm:$0xf]
        %v280 = vmax.f32 %v279, %v274
        %281 = vst [vmem:[%s278] sm:$0xf] %v280
        // Predicated region
        $region41: #{tpu_custom_call.1} parent=27 // pred_check
          %p282 = pneg %p233
        $region42: #{tpu_custom_call.1} parent=27 // pred_check_branch
          %284 = sbr.rel (%p282) target = $region44
        $region43: #{tpu_custom_call.1} parent=27 // pred_region
          %v285 = vld [vmem:[#allocation2] sm:$0xf]
          %v286 = vld [vmem:[#allocation2 + $0x4] sm:$0xf]
          %vm287 = vcmask 1043456
          %v288 = vsel %vm287, %v285, -inf
          %289 = vmax.xlane.f32.xlu0 %v288
          %v290 = vpop.xlane.xlu0 %289
          %v291 = vsel %vm287, %v286, -inf
          %292 = vmax.xlane.f32.xlu0 %v291
          %v293 = vpop.xlane.xlu0 %292
          %v296 = vlaneseq
          %v297 = vand.u32 %v296, 127
          %v298 = vlaneseq
          %v299 = vshrl.u32 %v298, 7
          %v300 = vsub.s32 %v297, %v299
          %v301 = vrot.slane %v290, %v300
          %v302 = vlaneseq
          %v303 = vshrl.u32 %v302, 7
          %v304 = vsub.s32 %v297, %v303
          %v305 = vrot.slane %v293, %v304
          %vm306 = vcmask 1041409
          %v307 = vsel %vm306, %v305, %v301
          %vm309 = vcmask 25600
          %310 = vst.msk [vmem:[%s230] sm:$0x3] %vm309, %v307
        $region44: #{tpu_custom_call.1} parent=27 // pred_fallthru
          _
        %s311 = sand.u32 %s109, 1
        %s312 = scalar_lea.sflag [#allocation5], %s311
        %s313 = sand.u32 %s109, 1
        %s314 = smul.addr %s313, 2
        %s315 = scalar_lea.vmem [#allocation8], %s314
        // Predicated region
        $region45: #{tpu_custom_call.1} parent=27 // pred_check
          %p316 = pneg %p119
        $region46: #{tpu_custom_call.1} parent=27 // pred_check_branch
          %318 = sbr.rel (%p316) target = $region48
        $region47: #{tpu_custom_call.1} parent=27 // pred_region
          %s320 = ssub.s32 32, 32
          %321 = vsyncadd %s312, %s320
          %s322 = sadd.s32 %s28, %s27
          %s323 = smul.addr %s322, 32
          %s324 = scalar_lea.hbm %s2, %s323
          %s326 = sshll.u32 %s315, 4
          %s327 = int_to_ptr.vmem [resolvable:$true] %s326
          %329 = dma.vmem_to_hbm [thread:$0]  %s327, 32, %s324, %s312
        $region48: #{tpu_custom_call.1} parent=27 // pred_fallthru
          _
      $region28: #{tpu_custom_call.1} parent=5 // pred_fallthru
        _
      %p330 = scmp.le.s32.totalorder 2, %s17
      // Predicated region
      $region49: #{tpu_custom_call.1} parent=5 // pred_check
        %p331 = pneg %p330
      $region50: #{tpu_custom_call.1} parent=5 // pred_check_branch
        %333 = sbr.rel (%p331) target = $region52
      $region51: #{tpu_custom_call.1} parent=5 // pred_region
        %s334 = ssub.s32 %s17, 2
        // Predicated region
        $region53: #{tpu_custom_call.1} parent=51 // pred_check
          %p335 = pneg %p125
        $region54: #{tpu_custom_call.1} parent=51 // pred_check_branch
          %337 = sbr.rel (%p335) target = $region56
        $region55: #{tpu_custom_call.1} parent=51 // pred_region
          %s338 = sand.u32 %s110, 1
          %s339 = scalar_lea.sflag [#allocation5], %s338
          %s340 = sand.u32 %s110, 1
          %s341 = smul.addr %s340, 2
          %s342 = scalar_lea.vmem [#allocation8], %s341
          %343 = dma.done %s339, 32
        $region56: #{tpu_custom_call.1} parent=51 // pred_fallthru
          _
      $region52: #{tpu_custom_call.1} parent=5 // pred_fallthru
        _
    $region6: #{tpu_custom_call.1} parent=1 // loop_footer
      %s21 = sadd.s32 1, %s17
    $region7: #{tpu_custom_call.1} parent=1 // loop_footer_branch
      %16 = sbr.rel target = $region3
    $region8: #{tpu_custom_call.1} parent=1 // loop_exit
      _
    %344 = vsyncpa [#allocation4], 1
    %s345 = scalar_lea.sflag [#allocation4], 1
    %346 = vsyncpa %s345, 1
    %347 = vsyncpa [#allocation7], 1
    %s348 = scalar_lea.sflag [#allocation7], 1
    %349 = vsyncpa %s348, 1
    %350 = vsyncpa [#allocation5], 1
    %s351 = scalar_lea.sflag [#allocation5], 1
    %352 = vsyncpa %s351, 1

</llo_original>
